<compile_context>
chip_gen: v7x
topology: tpu7x:2x2x1
jax: 0.10.0
libtpu: 0.0.40
codegen_flags: <defaults>
</compile_context>

<pallas_src>
import functools

import jax
import jax.numpy as jnp
from jax import lax
from jax.experimental import pallas as pl
from jax.experimental.pallas import tpu as pltpu


def _pool_fc_kernel(h_ref, m_ref, w_ref, ba_ref, bf_ref, out_ref, *,
                    b_total, ragged):
    # h_ref  : (TB, S, H)  hidden-state tile, native dtype (bf16/f32) -> MXU directly
    # m_ref  : (TB, 1, S)  attention mask as float (0 = padding)
    # w_ref  : (2, H)      stacked [attention_pooling.weight ; fc.weight]
    # ba_ref : (1,) SMEM   attention_pooling.bias
    # bf_ref : (1,) SMEM   fc.bias
    # out_ref: (1, 1, TB)  lane-dense output slab for this batch tile
    TB, S, H = h_ref.shape

    h = h_ref[...]                               # native dtype, no f32 copy
    w = w_ref[...]                               # (2, H), same dtype as h

    # Single fused projection (one pass over h):
    #   proj[:, 0] = <h, wa>  (attention score, pre-bias)
    #   proj[:, 1] = <h, wf>  (per-token fc value)
    hf = h.reshape(TB * S, H)
    proj = lax.dot_general(hf, w, (((1,), (1,)), ((), ())),
                           preferred_element_type=jnp.float32)    # (TB*S, 2)
    proj = proj.reshape(TB, S, 2)
    score = proj[..., 0] + ba_ref[0]             # (TB, S) f32, sublane-dense
    fcv = proj[..., 1]                           # (TB, S) f32

    mask = m_ref[...].reshape(TB, S)             # (TB, S)
    score = jnp.where(mask == 0.0, jnp.float32(-1e9), score)      # masked_fill

    if ragged:
        # Last batch tile can hang past B: zero invalid rows so stale VMEM
        # contents cannot turn into NaN/Inf (their outputs are sliced off later).
        row = (lax.broadcasted_iota(jnp.int32, (TB, S), 0)
               + pl.program_id(0) * TB)
        valid = row < b_total
        score = jnp.where(valid, score, 0.0)
        fcv = jnp.where(valid, fcv, 0.0)

    # Softmax over S fused with the fc head (linearity of fc):
    #   out_b = sum_s softmax(score)_{b,s} * fcv_{b,s} + bf
    s_max = jnp.max(score, axis=-1, keepdims=True)                # (TB, 1)
    e = jnp.exp(score - s_max)                                     # (TB, S)
    denom = jnp.sum(e, axis=-1, keepdims=True)                     # (TB, 1)
    numer = jnp.sum(e * fcv, axis=-1, keepdims=True)               # (TB, 1)
    out_vec = numer / denom + bf_ref[0]                            # (TB, 1)

    out_ref[...] = out_vec.reshape(1, 1, TB).astype(out_ref.dtype)


def _vmem_limit_bytes():
    # ~75% of physical VMEM: ~48 MiB on v7x (64 MiB/TC), ~96 MiB on v5e/v6e (128 MiB).
    try:
        cap = pltpu.get_tpu_info().vmem_capacity_bytes
    except Exception:  # conservative fallback (v7x-sized)
        cap = 64 * 1024 * 1024
    return min(int(cap) * 3 // 4, 100 * 1024 * 1024)


def _choose_tb(B, S, H, itemsize, vmem_limit_bytes):
    # Bytes resident per batch row of the tile:
    #   double-buffered native-dtype hidden row + double-buffered mask row
    #   + small f32 in-kernel temps (proj/score/e/fcv).
    per_row = 2 * S * H * itemsize + 2 * S * 4 + 8 * S * 4
    budget = int(vmem_limit_bytes * 0.7)          # headroom for weights/output/etc.
    tb = max(1, budget // per_row)
    tb = min(tb, B)
    if B >= 16:
        # Keep at least 2 grid tiles so both v7x TensorCores get work; on
        # v5e/v6e this only adds one ~0.35us grid step.
        tb = min(tb, (B + 1) // 2)
    if 8 <= tb < B:
        tb = (tb // 8) * 8                        # sublane-aligned
    return int(tb)


def attn_pool_fc(last_hidden_state, attn_mask, wa, ba, wf, bf):
    """last_hidden_state: (B, S, H) (any float dtype); attn_mask: (B, S).

    wa: (1, H)  attention_pooling.weight   ba: (1,)  attention_pooling.bias
    wf: (1, H)  fc.weight                  bf: (1,)  fc.bias
    Returns (B, 1) float32 scores.
    """
    B, S, H = last_hidden_state.shape
    dtype = last_hidden_state.dtype
    itemsize = jnp.dtype(dtype).itemsize

    vmem_limit = _vmem_limit_bytes()
    tb = _choose_tb(B, S, H, itemsize, vmem_limit)
    num_tiles = pl.cdiv(B, tb)

    mask_f = attn_mask.astype(jnp.float32).reshape(B, 1, S)
    wstack = jnp.concatenate(
        [wa.reshape(1, H), wf.reshape(1, H)], axis=0).astype(dtype)   # (2, H)
    ba1 = ba.reshape(1).astype(jnp.float32)
    bf1 = bf.reshape(1).astype(jnp.float32)

    cost = pl.CostEstimate(
        flops=int(4 * B * S * H + 8 * B * S),
        transcendentals=int(B * S),
        bytes_accessed=int(B * S * H * itemsize + B * S * 4
                           + num_tiles * tb * 4 + 2 * H * itemsize + 8),
    )

    kernel = functools.partial(_pool_fc_kernel, b_total=B,
                               ragged=(B % tb != 0))

    out = pl.pallas_call(
        kernel,
        out_shape=jax.ShapeDtypeStruct((num_tiles, 1, tb), jnp.float32),
        grid_spec=pltpu.PrefetchScalarGridSpec(
            num_scalar_prefetch=0,
            grid=(num_tiles,),
            in_specs=[
                pl.BlockSpec((tb, S, H), lambda t: (t, 0, 0)),      # hidden tile
                pl.BlockSpec((tb, 1, S), lambda t: (t, 0, 0)),      # mask tile
                pl.BlockSpec((2, H), lambda t: (0, 0)),             # [wa; wf] resident
                pl.BlockSpec(memory_space=pltpu.MemorySpace.SMEM),  # ba
                pl.BlockSpec(memory_space=pltpu.MemorySpace.SMEM),  # bf
            ],
            out_specs=pl.BlockSpec((1, 1, tb), lambda t: (t, 0, 0)),
        ),
        compiler_params=pltpu.CompilerParams(
            dimension_semantics=("parallel",),
            vmem_limit_bytes=vmem_limit,
        ),
        cost_estimate=cost,
    )(last_hidden_state, mask_f, wstack, ba1, bf1)

    return out.reshape(num_tiles * tb)[:B].reshape(B, 1)


def reference(last_hidden_state, attn_mask, wa, ba, wf, bf):
    """Pure-JAX reference of the PyTorch forward (post-BERT part)."""
    h = last_hidden_state.astype(jnp.float32)
    m = attn_mask.astype(jnp.float32)
    score = jnp.einsum("bsh,h->bs", h, wa.reshape(-1)) + ba.reshape(())
    score = jnp.where(m == 0.0, -1e9, score)
    weight = jax.nn.softmax(score, axis=1)
    attn_pooled = jnp.einsum("bs,bsh->bh", weight, h)
    return attn_pooled @ wf.reshape(1, -1).T + bf.reshape(1, 1)


if __name__ == "__main__":
    key = jax.random.PRNGKey(0)
    B, S, H = 2, 8, 32          # small shapes consistent with (batch, seq, hidden)
    VOCAB = 100

    k_ids, k_emb, k_wa, k_ba, k_wf, k_bf = jax.random.split(key, 6)

    # Synthetic "BERT": deterministic embedding lookup -> last_hidden_state.
    input_ids = jax.random.randint(k_ids, (B, S), 0, VOCAB, dtype=jnp.int32)
    attn_mask = jnp.array([[1, 1, 1, 1, 1, 1, 0, 0],
                           [1, 1, 1, 1, 0, 0, 0, 0]], dtype=jnp.int32)
    emb_table = jax.random.normal(k_emb, (VOCAB, H), dtype=jnp.float32) * 0.1
    last_hidden_state = emb_table[input_ids]        # (B, S, H), plain JAX glue

    # Parameters in PyTorch nn.Linear(hidden, 1) layout.
    wa = jax.random.normal(k_wa, (1, H), dtype=jnp.float32) * 0.05   # attention_pooling.weight
    ba = jax.random.normal(k_ba, (1,), dtype=jnp.float32) * 0.05     # attention_pooling.bias
    wf = jax.random.normal(k_wf, (1, H), dtype=jnp.float32) * 0.05   # fc.weight
    bf = jax.random.normal(k_bf, (1,), dtype=jnp.float32) * 0.05     # fc.bias

    out = attn_pool_fc(last_hidden_state, attn_mask, wa, ba, wf, bf)
    out = jax.block_until_ready(out)

    ref = reference(last_hidden_state, attn_mask, wa, ba, wf, bf)
    assert out.shape == (B, 1), out.shape
    assert jnp.allclose(out, ref, atol=1e-5, rtol=1e-4), (out, ref)

    print("KERNEL_OK")
</pallas_src>

<mosaic_0001>
module attributes {stable_mosaic.version = 11 : i64} {
  func.func @_pool_fc_kernel(%arg0: i32, %arg1: memref<2x8x32xf32, #tpu.memory_space<vmem>>, %arg2: memref<2x1x8xf32, #tpu.memory_space<vmem>>, %arg3: memref<2x32xf32, #tpu.memory_space<vmem>>, %arg4: memref<1xf32, #tpu.memory_space<smem>>, %arg5: memref<1xf32, #tpu.memory_space<smem>>, %arg6: memref<1x1x2xf32, #tpu.memory_space<vmem>>) attributes {dimension_semantics = [#tpu.dimension_semantics<parallel>], iteration_bounds = array<i64: 1>, scalar_prefetch = 0 : i64, scratch_operands = 0 : i64, tpu.core_type = #tpu.core_type<tc>, window_params = [{transform_indices = @transform_0, window_bounds = array<i64: 2, 8, 32>}, {transform_indices = @transform_1, window_bounds = array<i64: 2, 1, 8>}, {pipeline_mode = #tpu.pipeline_mode<synchronous>, transform_indices = @transform_2, window_bounds = array<i64: 2, 32>}, {transform_indices = @transform_3, window_bounds = array<i64: 1>}, {transform_indices = @transform_4, window_bounds = array<i64: 1>}, {transform_indices = @transform_5, window_bounds = array<i64: 1, 1, 2>}]} {
    %c0 = arith.constant 0 : index
    %c0_0 = arith.constant 0 : index
    %c0_1 = arith.constant 0 : index
    %0 = vector.load %arg1[%c0, %c0_0, %c0_1] : memref<2x8x32xf32, #tpu.memory_space<vmem>>, vector<2x8x32xf32>
    %c0_2 = arith.constant 0 : index
    %c0_3 = arith.constant 0 : index
    %1 = vector.load %arg3[%c0_2, %c0_3] : memref<2x32xf32, #tpu.memory_space<vmem>>, vector<2x32xf32>
    %2 = vector.shape_cast %0 : vector<2x8x32xf32> to vector<16x32xf32>
    %cst = arith.constant dense<0.000000e+00> : vector<16x2xf32>
    %3 = tpu.matmul %2, %1, %cst {dimension_numbers = #tpu.dot_dimension_numbers<[1], [1], [0], [0], [0, 0, 1, 0], [], []>} : vector<16x32xf32>, vector<2x32xf32>, vector<16x2xf32> -> vector<16x2xf32>
    %4 = vector.shape_cast %3 : vector<16x2xf32> to vector<2x8x2xf32>
    %5 = vector.extract_strided_slice %4 {offsets = [0, 0, 0], sizes = [2, 8, 1], strides = [1, 1, 1]} : vector<2x8x2xf32> to vector<2x8x1xf32>
    %6 = vector.shape_cast %5 : vector<2x8x1xf32> to vector<2x8xf32>
    %c0_4 = arith.constant 0 : index
    %7 = memref.load %arg4[%c0_4] : memref<1xf32, #tpu.memory_space<smem>>
    %8 = vector.broadcast %7 : f32 to vector<2x8xf32>
    %9 = arith.addf %6, %8 : vector<2x8xf32>
    %10 = vector.extract_strided_slice %4 {offsets = [0, 0, 1], sizes = [2, 8, 1], strides = [1, 1, 1]} : vector<2x8x2xf32> to vector<2x8x1xf32>
    %11 = vector.shape_cast %10 : vector<2x8x1xf32> to vector<2x8xf32>
    %c0_5 = arith.constant 0 : index
    %c0_6 = arith.constant 0 : index
    %c0_7 = arith.constant 0 : index
    %12 = vector.load %arg2[%c0_5, %c0_6, %c0_7] : memref<2x1x8xf32, #tpu.memory_space<vmem>>, vector<2x1x8xf32>
    %13 = vector.shape_cast %12 : vector<2x1x8xf32> to vector<2x8xf32>
    %cst_8 = arith.constant 0.000000e+00 : f32
    %14 = vector.broadcast %cst_8 : f32 to vector<2x8xf32>
    %15 = arith.cmpf oeq, %13, %14 : vector<2x8xf32>
    %cst_9 = arith.constant -1.000000e+09 : f32
    %16 = vector.broadcast %cst_9 : f32 to vector<2x8xf32>
    %17 = arith.select %15, %16, %9 : vector<2x8xi1>, vector<2x8xf32>
    %cst_10 = arith.constant dense<0xFF800000> : vector<2xf32>
    %18 = vector.multi_reduction <maximumf>, %17, %cst_10 [1] : vector<2x8xf32> to vector<2xf32>
    %19 = vector.shape_cast %18 : vector<2xf32> to vector<2x1xf32>
    %20 = vector.broadcast %19 : vector<2x1xf32> to vector<2x8xf32>
    %21 = arith.subf %17, %20 : vector<2x8xf32>
    %22 = math.exp %21 : vector<2x8xf32>
    %cst_11 = arith.constant dense<0.000000e+00> : vector<2xf32>
    %23 = vector.multi_reduction <add>, %22, %cst_11 [1] : vector<2x8xf32> to vector<2xf32>
    %24 = vector.shape_cast %23 : vector<2xf32> to vector<2x1xf32>
    %25 = arith.mulf %22, %11 : vector<2x8xf32>
    %cst_12 = arith.constant dense<0.000000e+00> : vector<2xf32>
    %26 = vector.multi_reduction <add>, %25, %cst_12 [1] : vector<2x8xf32> to vector<2xf32>
    %27 = vector.shape_cast %26 : vector<2xf32> to vector<2x1xf32>
    %28 = arith.divf %27, %24 : vector<2x1xf32>
    %c0_13 = arith.constant 0 : index
    %29 = memref.load %arg5[%c0_13] : memref<1xf32, #tpu.memory_space<smem>>
    %30 = vector.broadcast %29 : f32 to vector<2x1xf32>
    %31 = arith.addf %28, %30 : vector<2x1xf32>
    %32 = vector.shape_cast %31 : vector<2x1xf32> to vector<1x1x2xf32>
    %c0_14 = arith.constant 0 : index
    %c0_15 = arith.constant 0 : index
    %c0_16 = arith.constant 0 : index
    %33 = vector.load %arg6[%c0_14, %c0_15, %c0_16] : memref<1x1x2xf32, #tpu.memory_space<vmem>>, vector<1x1x2xf32>
    tpu.vector_store %arg6[%c0_14, %c0_15, %c0_16], %32 {strides = array<i32>} : memref<1x1x2xf32, #tpu.memory_space<vmem>>, vector<1x1x2xf32>,
    return
  }
  func.func @transform_0(%arg0: i32) -> (i32, i32, i32) {
    %c0_i32 = arith.constant 0 : i32
    %c0_i32_0 = arith.constant 0 : i32
    %c0_i32_1 = arith.constant 0 : i32
    return %arg0, %c0_i32, %c0_i32_0 : i32, i32, i32
  }
  func.func @transform_1(%arg0: i32) -> (i32, i32, i32) {
    %c0_i32 = arith.constant 0 : i32
    %c0_i32_0 = arith.constant 0 : i32
    %c0_i32_1 = arith.constant 0 : i32
    return %arg0, %c0_i32, %c0_i32_0 : i32, i32, i32
  }
  func.func @transform_2(%arg0: i32) -> (i32, i32) {
    %c0_i32 = arith.constant 0 : i32
    %c0_i32_0 = arith.constant 0 : i32
    %c0_i32_1 = arith.constant 0 : i32
    return %c0_i32, %c0_i32_0 : i32, i32
  }
  func.func @transform_3(%arg0: i32) -> i32 {
    %c0_i32 = arith.constant 0 : i32
    %c0_i32_0 = arith.constant 0 : i32
    return %c0_i32 : i32
  }
  func.func @transform_4(%arg0: i32) -> i32 {
    %c0_i32 = arith.constant 0 : i32
    %c0_i32_0 = arith.constant 0 : i32
    return %c0_i32 : i32
  }
  func.func @transform_5(%arg0: i32) -> (i32, i32, i32) {
    %c0_i32 = arith.constant 0 : i32
    %c0_i32_0 = arith.constant 0 : i32
    %c0_i32_1 = arith.constant 0 : i32
    return %arg0, %c0_i32, %c0_i32_0 : i32, i32, i32
  }
}

</mosaic_0001>

<llo_original>
// kernel: tpu_custom_call.1
$region0: #{tpu_custom_call.1}
  #allocation0 [shape = 'u32[]', space=smem, size = 0x4, offset = 0x4, fixed_abs, tag = 'smem constant byte address 0x4 - core index']
  #allocation1 [shape = 'u32[144,128]{1,0:T(1,128)}', space=vmem, size = 0x12000, scoped, tag = 'internal scratch']
  #allocation2 [shape = 'f32[1]{0:T(128)S(6)}', space=smem, size = 0x200, scoped, tag = 'scoped memory for tpu_custom_call.1']
  #allocation3 [shape = 'f32[1]{0:T(128)S(6)}', space=smem, size = 0x200, scoped, tag = 'scoped memory for tpu_custom_call.1']
  %s0 = inlined_call_operand.hbm [shape: f32[2,8,32], index: 0, kind: input, shape index: {}]
  %s1 = inlined_call_operand.vmem [shape: f32[2,1,8], index: 1, kind: input, shape index: {}]
  %s2 = inlined_call_operand.vmem [shape: f32[2,32], index: 2, kind: input, shape index: {}]
  %s3 = inlined_call_operand.<no memory space> [shape: f32[1], index: 3, kind: input, shape index: {}]
  %s4 = inlined_call_operand.<no memory space> [shape: f32[1], index: 4, kind: input, shape index: {}]
  %s5 = inlined_call_operand.hbm [shape: f32[1,1,2], index: 5, kind: output, shape index: {}]
  %s6 = sld [smem:[#allocation0]]
  $region34: #{tpu_custom_call.1} parent=0
    _
  %s8 = ssub.s32 1, %s6
  %s9 = scalar_select 0, %s8, %s6
  %10 = sst [smem:[#allocation2]] %s3
  %11 = sst [smem:[#allocation3]] %s4
  $region1: #{tpu_custom_call.1} parent=0
    #allocation4 [shape = 'u8[8192]{0}', space=vmem, size = 0x2000, scoped, tag = 'input window, operand 0, single buffered']
    #allocation5 [shape = 's32[1]{0}', space=sflag, size = 0x4, scoped, tag = 'scoped memory for tpu_custom_call.1']
    #allocation6 [shape = 's32[1]{0}', space=sflag, size = 0x4, scoped, tag = 'scoped memory for tpu_custom_call.1']
    #allocation7 [shape = 'u8[512]{0}', space=vmem, size = 0x400, scoped, tag = 'output window, operand 0, single buffered']
    %12 = vsyncpa [#allocation5], 0
    %13 = vsyncpa [#allocation6], 0
    // Predicated region
    $region2: #{tpu_custom_call.1} parent=1 // pred_check
      _
    $region3: #{tpu_custom_call.1} parent=1 // pred_check_branch
      %15 = sbr.rel (0) target = $region5
    $region4: #{tpu_custom_call.1} parent=1 // pred_region
      %s17 = ssub.s32 256, 256
      %18 = vsyncadd [#allocation5], %s17
      %s19 = sshll.u32 [#allocation4], 4
      %s20 = int_to_ptr.vmem [resolvable:$true] %s19
      %25 = dma.hbm_to_vmem [thread:$0]  %s0, 256, %s20, [#allocation5], 128, 128, 8
    $region5: #{tpu_custom_call.1} parent=1 // pred_fallthru
      _
    // Predicated region
    $region6: #{tpu_custom_call.1} parent=1 // pred_check
      _
    $region7: #{tpu_custom_call.1} parent=1 // pred_check_branch
      %27 = sbr.rel (0) target = $region9
    $region8: #{tpu_custom_call.1} parent=1 // pred_region
      _
    $region9: #{tpu_custom_call.1} parent=1 // pred_fallthru
      _
    // Predicated region
    $region10: #{tpu_custom_call.1} parent=1 // pred_check
      _
    $region11: #{tpu_custom_call.1} parent=1 // pred_check_branch
      %29 = sbr.rel (0) target = $region13
    $region12: #{tpu_custom_call.1} parent=1 // pred_region
      _
    $region13: #{tpu_custom_call.1} parent=1 // pred_fallthru
      _
    // Predicated region
    $region14: #{tpu_custom_call.1} parent=1 // pred_check
      _
    $region15: #{tpu_custom_call.1} parent=1 // pred_check_branch
      %31 = sbr.rel (0) target = $region17
    $region16: #{tpu_custom_call.1} parent=1 // pred_region
      _
    $region17: #{tpu_custom_call.1} parent=1 // pred_fallthru
      _
    // Predicated region
    $region18: #{tpu_custom_call.1} parent=1 // pred_check
      _
    $region19: #{tpu_custom_call.1} parent=1 // pred_check_branch
      %33 = sbr.rel (0) target = $region21
    $region20: #{tpu_custom_call.1} parent=1 // pred_region
      _
    $region21: #{tpu_custom_call.1} parent=1 // pred_fallthru
      _
    // Predicated region
    $region22: #{tpu_custom_call.1} parent=1 // pred_check
      _
    $region23: #{tpu_custom_call.1} parent=1 // pred_check_branch
      %35 = sbr.rel (0) target = $region25
    $region24: #{tpu_custom_call.1} parent=1 // pred_region
      %36 = dma.done [#allocation5], 256
    $region25: #{tpu_custom_call.1} parent=1 // pred_fallthru
      _
    %v37 = vld [vmem:[#allocation4] sm:$0xff]
    %v38 = vld [vmem:[#allocation4 + $0x8] sm:$0xff]
    %v39 = vld [vmem:[%s2] sm:$0x3]
    %vm40 = vcmask 261120
    %v42 = vsel %vm40, %v37, 0
    %v45 = vsel %vm40, %v38, 0
    %v48 = vsel %vm40, %v39, 0
    %50 = vmatprep.subr.mxu0 0.0
    %51 = vmatpush1.xpose.msra.mxu0 %v48
    %52 = vmatprep.subr.mxu0 0.0
    %53 = vmatpush1.xpose.msra.mxu0 0.0
    %54 = vmatprep.subr.mxu0 0.0
    %55 = vmatpush1.xpose.msra.mxu0 0.0
    %56 = vmatprep.subr.mxu0 0.0
    %57 = vmatpush1.xpose.msra.mxu0 0.0
    %58 = vmatprep.subr.mxu0 0.0
    %59 = vmatpush1.xpose.msra.mxu0 0.0
    %60 = vmatprep.subr.mxu0 0.0
    %61 = vmatpush1.xpose.msra.mxu0 0.0
    %62 = vmatprep.subr.mxu0 0.0
    %63 = vmatpush1.xpose.msra.mxu0 0.0
    %64 = vmatprep.subr.mxu0 0.0
    %65 = vmatpush1.xpose.msra.mxu0 0.0
    %66 = vmatprep.subr.mxu0 0.0
    %67 = vmatpush1.xpose.msra.mxu0 0.0
    %68 = vmatprep.subr.mxu0 0.0
    %69 = vmatpush1.xpose.msra.mxu0 0.0
    %70 = vmatprep.subr.mxu0 0.0
    %71 = vmatpush1.xpose.msra.mxu0 0.0
    %72 = vmatprep.subr.mxu0 0.0
    %73 = vmatpush1.xpose.msra.mxu0 0.0
    %74 = vmatprep.subr.mxu0 0.0
    %75 = vmatpush1.xpose.msra.mxu0 0.0
    %76 = vmatprep.subr.mxu0 0.0
    %77 = vmatpush1.xpose.msra.mxu0 0.0
    %78 = vmatprep.subr.mxu0 0.0
    %79 = vmatpush1.xpose.msra.mxu0 0.0
    %80 = vmatprep.subr.mxu0 0.0
    %81 = vmatpush1.xpose.msra.mxu0 0.0
    %82 = vmatprep.subr.mxu0 0.0
    %83 = vmatpush1.xpose.msra.mxu0 0.0
    %84 = vmatprep.subr.mxu0 0.0
    %85 = vmatpush1.xpose.msra.mxu0 0.0
    %86 = vmatprep.subr.mxu0 0.0
    %87 = vmatpush1.xpose.msra.mxu0 0.0
    %88 = vmatprep.subr.mxu0 0.0
    %89 = vmatpush1.xpose.msra.mxu0 0.0
    %90 = vmatprep.subr.mxu0 0.0
    %91 = vmatpush1.xpose.msra.mxu0 0.0
    %92 = vmatprep.subr.mxu0 0.0
    %93 = vmatpush1.xpose.msra.mxu0 0.0
    %94 = vmatprep.subr.mxu0 0.0
    %95 = vmatpush1.xpose.msra.mxu0 0.0
    %96 = vmatprep.subr.mxu0 0.0
    %97 = vmatpush1.xpose.msra.mxu0 0.0
    %98 = vmatprep.subr.mxu0 0.0
    %99 = vmatpush1.xpose.msra.mxu0 0.0
    %100 = vmatprep.subr.mxu0 0.0
    %101 = vmatpush1.xpose.msra.mxu0 0.0
    %102 = vmatprep.subr.mxu0 0.0
    %103 = vmatpush1.xpose.msra.mxu0 0.0
    %104 = vmatprep.subr.mxu0 0.0
    %105 = vmatpush1.xpose.msra.mxu0 0.0
    %106 = vmatprep.subr.mxu0 0.0
    %107 = vmatpush1.xpose.msra.mxu0 0.0
    %108 = vmatprep.subr.mxu0 0.0
    %109 = vmatpush1.xpose.msra.mxu0 0.0
    %110 = vmatprep.subr.mxu0 0.0
    %111 = vmatpush1.xpose.msra.mxu0 0.0
    %112 = vmatprep.subr.mxu0 0.0
    %113 = vmatpush1.xpose.msra.mxu0 0.0
    %114 = vmatprep.mubr.f32.mxu0 0.0
    %115 = vmatmul.mubr.f32.gmra.mrb[0].mxu0 %v42
    %v116 = vpop.f32.mrb[0].mxu0
    %v117 = vadd.f32 0.0, %v116
    %v118 = vpop.f32.mrb[0].mxu0
    %119 = vmatprep.mubr.f32.mxu0 0.0
    %120 = vmatmul.mubr.f32.gmra.mrb[0].mxu0 %v45
    %v121 = vpop.f32.mrb[0].mxu0
    %v122 = vadd.f32 0.0, %v121
    %v123 = vpop.f32.mrb[0].mxu0
    %124 = vdwg.mxu0
    %s125 = sld [smem:[#allocation2]]
    %v126 = vstv %s125
    %v127 = vadd.f32 %v117, %v126
    %v128 = vadd.f32 %v122, %v126
    %v129 = vld [vmem:[%s1] sm:$0x1]
    %v130 = vld [vmem:[%s1 + $0x1] sm:$0x1]
    %vm131 = vcmp.eq.f32.partialorder %v129, 0.0
    %vm132 = vcmp.eq.f32.partialorder %v130, 0.0
    %v135 = vcombine.high %v127, %v127
    %v137 = vunpack.c.l.s4 1966171168
    %v138 = vunpack.c.0.s8 %v137
    %v139 = vlaneseq
    %v140 = vshrl.u32 %v139, 7
    %v141 = vsub.s32 %v138, %v140
    %v142 = vrot.slane %v127, %v141
    %v144 = vunpack.c.l.s4 1966171168
    %v145 = vunpack.c.0.s8 %v144
    %v146 = vlaneseq
    %v147 = vshrl.u32 %v146, 7
    %v148 = vsub.s32 %v145, %v147
    %v149 = vrot.slane %v135, %v148
    %v150 = vcombine.high %v142, %v142
    %v151 = vcombine.high %v149, %v149
    %v153 = vunpack.c.l.s4 1966171168
    %v154 = vunpack.c.0.s8 %v153
    %v155 = vlaneseq
    %v156 = vshrl.u32 %v155, 7
    %v157 = vsub.s32 %v154, %v156
    %v158 = vrot.slane %v142, %v157
    %v160 = vunpack.c.l.s4 1966171168
    %v161 = vunpack.c.0.s8 %v160
    %v162 = vlaneseq
    %v163 = vshrl.u32 %v162, 7
    %v164 = vsub.s32 %v161, %v163
    %v165 = vrot.slane %v149, %v164
    %v167 = vunpack.c.l.s4 1966171168
    %v168 = vunpack.c.0.s8 %v167
    %v169 = vlaneseq
    %v170 = vshrl.u32 %v169, 7
    %v171 = vsub.s32 %v168, %v170
    %v172 = vrot.slane %v150, %v171
    %v174 = vunpack.c.l.s4 1966171168
    %v175 = vunpack.c.0.s8 %v174
    %v176 = vlaneseq
    %v177 = vshrl.u32 %v176, 7
    %v178 = vsub.s32 %v175, %v177
    %v179 = vrot.slane %v151, %v178
    %v180 = vcombine.high %v158, %v158
    %v181 = vcombine.high %v165, %v165
    %v182 = vcombine.high %v172, %v172
    %v183 = vcombine.high %v179, %v179
    %v184 = vcombine.high %v128, %v128
    %v186 = vunpack.c.l.s4 1966171168
    %v187 = vunpack.c.0.s8 %v186
    %v188 = vlaneseq
    %v189 = vshrl.u32 %v188, 7
    %v190 = vsub.s32 %v187, %v189
    %v191 = vrot.slane %v128, %v190
    %v193 = vunpack.c.l.s4 1966171168
    %v194 = vunpack.c.0.s8 %v193
    %v195 = vlaneseq
    %v196 = vshrl.u32 %v195, 7
    %v197 = vsub.s32 %v194, %v196
    %v198 = vrot.slane %v184, %v197
    %v199 = vcombine.high %v191, %v191
    %v200 = vcombine.high %v198, %v198
    %v202 = vunpack.c.l.s4 1966171168
    %v203 = vunpack.c.0.s8 %v202
    %v204 = vlaneseq
    %v205 = vshrl.u32 %v204, 7
    %v206 = vsub.s32 %v203, %v205
    %v207 = vrot.slane %v191, %v206
    %v209 = vunpack.c.l.s4 1966171168
    %v210 = vunpack.c.0.s8 %v209
    %v211 = vlaneseq
    %v212 = vshrl.u32 %v211, 7
    %v213 = vsub.s32 %v210, %v212
    %v214 = vrot.slane %v198, %v213
    %v216 = vunpack.c.l.s4 1966171168
    %v217 = vunpack.c.0.s8 %v216
    %v218 = vlaneseq
    %v219 = vshrl.u32 %v218, 7
    %v220 = vsub.s32 %v217, %v219
    %v221 = vrot.slane %v199, %v220
    %v223 = vunpack.c.l.s4 1966171168
    %v224 = vunpack.c.0.s8 %v223
    %v225 = vlaneseq
    %v226 = vshrl.u32 %v225, 7
    %v227 = vsub.s32 %v224, %v226
    %v228 = vrot.slane %v200, %v227
    %v229 = vcombine.high %v207, %v207
    %v230 = vcombine.high %v214, %v214
    %v231 = vcombine.high %v221, %v221
    %v232 = vcombine.high %v228, %v228
    %v233 = vcombine.low %v158, %v172
    %v234 = vcombine.low %v180, %v182
    %v235 = vcombine.low %v165, %v179
    %v236 = vcombine.low %v181, %v183
    %v238 = vunpack.c.l.s4 1966171168
    %v239 = vunpack.c.0.s8 %v238
    %v240 = vlaneseq
    %v241 = vshrl.u32 %v240, 7
    %v242 = vsub.s32 %v239, %v241
    %v243 = vrot.slane %v233, %v242
    %v245 = vunpack.c.l.s4 1966171168
    %v246 = vunpack.c.0.s8 %v245
    %v247 = vlaneseq
    %v248 = vshrl.u32 %v247, 7
    %v249 = vsub.s32 %v246, %v248
    %v250 = vrot.slane %v234, %v249
    %v252 = vunpack.c.l.s4 1966171168
    %v253 = vunpack.c.0.s8 %v252
    %v254 = vlaneseq
    %v255 = vshrl.u32 %v254, 7
    %v256 = vsub.s32 %v253, %v255
    %v257 = vrot.slane %v235, %v256
    %v259 = vunpack.c.l.s4 1966171168
    %v260 = vunpack.c.0.s8 %v259
    %v261 = vlaneseq
    %v262 = vshrl.u32 %v261, 7
    %v263 = vsub.s32 %v260, %v262
    %v264 = vrot.slane %v236, %v263
    %v265 = vcombine.low %v243, %v250
    %v266 = vcombine.low %v257, %v264
    %v268 = vunpack.c.l.s4 1966171168
    %v269 = vunpack.c.0.s8 %v268
    %v270 = vlaneseq
    %v271 = vshrl.u32 %v270, 7
    %v272 = vsub.s32 %v269, %v271
    %v273 = vrot.slane %v265, %v272
    %v275 = vunpack.c.l.s4 1966171168
    %v276 = vunpack.c.0.s8 %v275
    %v277 = vlaneseq
    %v278 = vshrl.u32 %v277, 7
    %v279 = vsub.s32 %v276, %v278
    %v280 = vrot.slane %v266, %v279
    %v281 = vcombine.low %v273, %v280
    %v282 = vcombine.low %v207, %v221
    %v283 = vcombine.low %v229, %v231
    %v284 = vcombine.low %v214, %v228
    %v285 = vcombine.low %v230, %v232
    %v287 = vunpack.c.l.s4 1966171168
    %v288 = vunpack.c.0.s8 %v287
    %v289 = vlaneseq
    %v290 = vshrl.u32 %v289, 7
    %v291 = vsub.s32 %v288, %v290
    %v292 = vrot.slane %v282, %v291
    %v294 = vunpack.c.l.s4 1966171168
    %v295 = vunpack.c.0.s8 %v294
    %v296 = vlaneseq
    %v297 = vshrl.u32 %v296, 7
    %v298 = vsub.s32 %v295, %v297
    %v299 = vrot.slane %v283, %v298
    %v301 = vunpack.c.l.s4 1966171168
    %v302 = vunpack.c.0.s8 %v301
    %v303 = vlaneseq
    %v304 = vshrl.u32 %v303, 7
    %v305 = vsub.s32 %v302, %v304
    %v306 = vrot.slane %v284, %v305
    %v308 = vunpack.c.l.s4 1966171168
    %v309 = vunpack.c.0.s8 %v308
    %v310 = vlaneseq
    %v311 = vshrl.u32 %v310, 7
    %v312 = vsub.s32 %v309, %v311
    %v313 = vrot.slane %v285, %v312
    %v314 = vcombine.low %v292, %v299
    %v315 = vcombine.low %v306, %v313
    %v317 = vunpack.c.l.s4 1966171168
    %v318 = vunpack.c.0.s8 %v317
    %v319 = vlaneseq
    %v320 = vshrl.u32 %v319, 7
    %v321 = vsub.s32 %v318, %v320
    %v322 = vrot.slane %v314, %v321
    %v324 = vunpack.c.l.s4 1966171168
    %v325 = vunpack.c.0.s8 %v324
    %v326 = vlaneseq
    %v327 = vshrl.u32 %v326, 7
    %v328 = vsub.s32 %v325, %v327
    %v329 = vrot.slane %v315, %v328
    %v330 = vcombine.low %v322, %v329
    %331 = vset.pattern.permute.xlu0 0
    %332 = vperm.xlu0 %331, %v281
    %v333 = vpop.permute.xlu0 %332
    %334 = vset.pattern.permute.xlu0 0
    %335 = vperm.xlu0 %334, %v330
    %v336 = vpop.permute.xlu0 %335
    %v337 = vlaneseq
    %v338 = vand.u32 %v337, 127
    %v339 = vlaneseq
    %v340 = vshrl.u32 %v339, 7
    %v341 = vsub.s32 %v338, %v340
    %v342 = vrot.slane %v333, %v341
    %v343 = vlaneseq
    %v344 = vshrl.u32 %v343, 7
    %v345 = vsub.s32 %v338, %v344
    %v346 = vrot.slane %v336, %v345
    %v348 = vunpack.c.l.s4 1966171168
    %v349 = vunpack.c.0.s8 %v348
    %v350 = vlaneseq
    %v351 = vshrl.u32 %v350, 7
    %v352 = vsub.s32 %v349, %v351
    %v353 = vrot.slane %v342, %v352
    %v355 = vunpack.c.l.s4 1966171168
    %v356 = vunpack.c.0.s8 %v355
    %v357 = vlaneseq
    %v358 = vshrl.u32 %v357, 7
    %v359 = vsub.s32 %v356, %v358
    %v360 = vrot.slane %v353, %v359
    %v362 = vunpack.c.l.s4 1966171168
    %v363 = vunpack.c.0.s8 %v362
    %v364 = vlaneseq
    %v365 = vshrl.u32 %v364, 7
    %v366 = vsub.s32 %v363, %v365
    %v367 = vrot.slane %v346, %v366
    %v369 = vunpack.c.l.s4 1966171168
    %v370 = vunpack.c.0.s8 %v369
    %v371 = vlaneseq
    %v372 = vshrl.u32 %v371, 7
    %v373 = vsub.s32 %v370, %v372
    %v374 = vrot.slane %v367, %v373
    %v377 = vsel %vm131, -1e+09, %v360
    %v378 = vsel %vm132, -1e+09, %v374
    %v381 = vcombine.low %v377, %v378
    %v383 = vunpack.c.l.s4 1966171168
    %v384 = vunpack.c.0.s8 %v383
    %v385 = vlaneseq
    %v386 = vshrl.u32 %v385, 7
    %v387 = vsub.s32 %v384, %v386
    %v388 = vrot.slane %v381, %v387
    %v390 = vunpack.c.l.s4 1966171168
    %v391 = vunpack.c.0.s8 %v390
    %v392 = vlaneseq
    %v393 = vshrl.u32 %v392, 7
    %v394 = vsub.s32 %v391, %v393
    %v395 = vrot.slane %v388, %v394
    %vm397 = vcmask 58368
    %v398 = vsel %vm397, %v395, -inf
    %399 = vmax.xlane.f32.xlu0 %v398
    %v400 = vpop.xlane.xlu0 %399
    %v402 = vlaneseq
    %v403 = vshrl.u32 %v402, 7
    %v404 = vsub.s32 0, %v403
    %v405 = vrot.slane %v400, %v404
    %v406 = vlaneseq
    %v407 = vshrl.u32 %v406, 7
    %v408 = vsub.s32 1, %v407
    %v409 = vrot.slane %v400, %v408
    %v412 = vsub.f32 %v377, %v405
    %v413 = vsub.f32 %v378, %v409
    %v414 = vmul.f32 %v412, 1.442695
    %v415 = vpow.pop %v414
    %v416 = vmul.f32 %v413, 1.442695
    %v417 = vpow.pop %v416
    %v420 = vcombine.low %v415, %v417
    %v422 = vunpack.c.l.s4 1966171168
    %v423 = vunpack.c.0.s8 %v422
    %v424 = vlaneseq
    %v425 = vshrl.u32 %v424, 7
    %v426 = vsub.s32 %v423, %v425
    %v427 = vrot.slane %v420, %v426
    %v429 = vunpack.c.l.s4 1966171168
    %v430 = vunpack.c.0.s8 %v429
    %v431 = vlaneseq
    %v432 = vshrl.u32 %v431, 7
    %v433 = vsub.s32 %v430, %v432
    %v434 = vrot.slane %v427, %v433
    %v436 = vsel %vm397, %v434, 0.0
    %437 = vadd.xlane.f32.xlu0 %v436
    %v438 = vpop.xlane.xlu0 %437
    %v441 = vcombine.high %v117, %v117
    %v443 = vunpack.c.l.s4 1966171168
    %v444 = vunpack.c.0.s8 %v443
    %v445 = vlaneseq
    %v446 = vshrl.u32 %v445, 7
    %v447 = vsub.s32 %v444, %v446
    %v448 = vrot.slane %v117, %v447
    %v450 = vunpack.c.l.s4 1966171168
    %v451 = vunpack.c.0.s8 %v450
    %v452 = vlaneseq
    %v453 = vshrl.u32 %v452, 7
    %v454 = vsub.s32 %v451, %v453
    %v455 = vrot.slane %v441, %v454
    %v456 = vcombine.high %v448, %v448
    %v457 = vcombine.high %v455, %v455
    %v459 = vunpack.c.l.s4 1966171168
    %v460 = vunpack.c.0.s8 %v459
    %v461 = vlaneseq
    %v462 = vshrl.u32 %v461, 7
    %v463 = vsub.s32 %v460, %v462
    %v464 = vrot.slane %v448, %v463
    %v466 = vunpack.c.l.s4 1966171168
    %v467 = vunpack.c.0.s8 %v466
    %v468 = vlaneseq
    %v469 = vshrl.u32 %v468, 7
    %v470 = vsub.s32 %v467, %v469
    %v471 = vrot.slane %v455, %v470
    %v473 = vunpack.c.l.s4 1966171168
    %v474 = vunpack.c.0.s8 %v473
    %v475 = vlaneseq
    %v476 = vshrl.u32 %v475, 7
    %v477 = vsub.s32 %v474, %v476
    %v478 = vrot.slane %v456, %v477
    %v480 = vunpack.c.l.s4 1966171168
    %v481 = vunpack.c.0.s8 %v480
    %v482 = vlaneseq
    %v483 = vshrl.u32 %v482, 7
    %v484 = vsub.s32 %v481, %v483
    %v485 = vrot.slane %v457, %v484
    %v486 = vcombine.high %v464, %v464
    %v487 = vcombine.high %v471, %v471
    %v488 = vcombine.high %v478, %v478
    %v489 = vcombine.high %v485, %v485
    %v490 = vcombine.high %v122, %v122
    %v492 = vunpack.c.l.s4 1966171168
    %v493 = vunpack.c.0.s8 %v492
    %v494 = vlaneseq
    %v495 = vshrl.u32 %v494, 7
    %v496 = vsub.s32 %v493, %v495
    %v497 = vrot.slane %v122, %v496
    %v499 = vunpack.c.l.s4 1966171168
    %v500 = vunpack.c.0.s8 %v499
    %v501 = vlaneseq
    %v502 = vshrl.u32 %v501, 7
    %v503 = vsub.s32 %v500, %v502
    %v504 = vrot.slane %v490, %v503
    %v505 = vcombine.high %v497, %v497
    %v506 = vcombine.high %v504, %v504
    %v508 = vunpack.c.l.s4 1966171168
    %v509 = vunpack.c.0.s8 %v508
    %v510 = vlaneseq
    %v511 = vshrl.u32 %v510, 7
    %v512 = vsub.s32 %v509, %v511
    %v513 = vrot.slane %v497, %v512
    %v515 = vunpack.c.l.s4 1966171168
    %v516 = vunpack.c.0.s8 %v515
    %v517 = vlaneseq
    %v518 = vshrl.u32 %v517, 7
    %v519 = vsub.s32 %v516, %v518
    %v520 = vrot.slane %v504, %v519
    %v522 = vunpack.c.l.s4 1966171168
    %v523 = vunpack.c.0.s8 %v522
    %v524 = vlaneseq
    %v525 = vshrl.u32 %v524, 7
    %v526 = vsub.s32 %v523, %v525
    %v527 = vrot.slane %v505, %v526
    %v529 = vunpack.c.l.s4 1966171168
    %v530 = vunpack.c.0.s8 %v529
    %v531 = vlaneseq
    %v532 = vshrl.u32 %v531, 7
    %v533 = vsub.s32 %v530, %v532
    %v534 = vrot.slane %v506, %v533
    %v535 = vcombine.high %v513, %v513
    %v536 = vcombine.high %v520, %v520
    %v537 = vcombine.high %v527, %v527
    %v538 = vcombine.high %v534, %v534
    %v539 = vcombine.low %v464, %v478
    %v540 = vcombine.low %v486, %v488
    %v541 = vcombine.low %v471, %v485
    %v542 = vcombine.low %v487, %v489
    %v544 = vunpack.c.l.s4 1966171168
    %v545 = vunpack.c.0.s8 %v544
    %v546 = vlaneseq
    %v547 = vshrl.u32 %v546, 7
    %v548 = vsub.s32 %v545, %v547
    %v549 = vrot.slane %v539, %v548
    %v551 = vunpack.c.l.s4 1966171168
    %v552 = vunpack.c.0.s8 %v551
    %v553 = vlaneseq
    %v554 = vshrl.u32 %v553, 7
    %v555 = vsub.s32 %v552, %v554
    %v556 = vrot.slane %v540, %v555
    %v558 = vunpack.c.l.s4 1966171168
    %v559 = vunpack.c.0.s8 %v558
    %v560 = vlaneseq
    %v561 = vshrl.u32 %v560, 7
    %v562 = vsub.s32 %v559, %v561
    %v563 = vrot.slane %v541, %v562
    %v565 = vunpack.c.l.s4 1966171168
    %v566 = vunpack.c.0.s8 %v565
    %v567 = vlaneseq
    %v568 = vshrl.u32 %v567, 7
    %v569 = vsub.s32 %v566, %v568
    %v570 = vrot.slane %v542, %v569
    %v571 = vcombine.low %v549, %v556
    %v572 = vcombine.low %v563, %v570
    %v574 = vunpack.c.l.s4 1966171168
    %v575 = vunpack.c.0.s8 %v574
    %v576 = vlaneseq
    %v577 = vshrl.u32 %v576, 7
    %v578 = vsub.s32 %v575, %v577
    %v579 = vrot.slane %v571, %v578
    %v581 = vunpack.c.l.s4 1966171168
    %v582 = vunpack.c.0.s8 %v581
    %v583 = vlaneseq
    %v584 = vshrl.u32 %v583, 7
    %v585 = vsub.s32 %v582, %v584
    %v586 = vrot.slane %v572, %v585
    %v587 = vcombine.low %v579, %v586
    %v588 = vcombine.low %v513, %v527
    %v589 = vcombine.low %v535, %v537
    %v590 = vcombine.low %v520, %v534
    %v591 = vcombine.low %v536, %v538
    %v593 = vunpack.c.l.s4 1966171168
    %v594 = vunpack.c.0.s8 %v593
    %v595 = vlaneseq
    %v596 = vshrl.u32 %v595, 7
    %v597 = vsub.s32 %v594, %v596
    %v598 = vrot.slane %v588, %v597
    %v600 = vunpack.c.l.s4 1966171168
    %v601 = vunpack.c.0.s8 %v600
    %v602 = vlaneseq
    %v603 = vshrl.u32 %v602, 7
    %v604 = vsub.s32 %v601, %v603
    %v605 = vrot.slane %v589, %v604
    %v607 = vunpack.c.l.s4 1966171168
    %v608 = vunpack.c.0.s8 %v607
    %v609 = vlaneseq
    %v610 = vshrl.u32 %v609, 7
    %v611 = vsub.s32 %v608, %v610
    %v612 = vrot.slane %v590, %v611
    %v614 = vunpack.c.l.s4 1966171168
    %v615 = vunpack.c.0.s8 %v614
    %v616 = vlaneseq
    %v617 = vshrl.u32 %v616, 7
    %v618 = vsub.s32 %v615, %v617
    %v619 = vrot.slane %v591, %v618
    %v620 = vcombine.low %v598, %v605
    %v621 = vcombine.low %v612, %v619
    %v623 = vunpack.c.l.s4 1966171168
    %v624 = vunpack.c.0.s8 %v623
    %v625 = vlaneseq
    %v626 = vshrl.u32 %v625, 7
    %v627 = vsub.s32 %v624, %v626
    %v628 = vrot.slane %v620, %v627
    %v630 = vunpack.c.l.s4 1966171168
    %v631 = vunpack.c.0.s8 %v630
    %v632 = vlaneseq
    %v633 = vshrl.u32 %v632, 7
    %v634 = vsub.s32 %v631, %v633
    %v635 = vrot.slane %v621, %v634
    %v636 = vcombine.low %v628, %v635
    %637 = vset.pattern.permute.xlu0 1
    %638 = vperm.xlu0 %637, %v587
    %v639 = vpop.permute.xlu0 %638
    %640 = vset.pattern.permute.xlu0 1
    %641 = vperm.xlu0 %640, %v636
    %v642 = vpop.permute.xlu0 %641
    %v643 = vlaneseq
    %v644 = vshrl.u32 %v643, 7
    %v645 = vsub.s32 %v338, %v644
    %v646 = vrot.slane %v639, %v645
    %v647 = vlaneseq
    %v648 = vshrl.u32 %v647, 7
    %v649 = vsub.s32 %v338, %v648
    %v650 = vrot.slane %v642, %v649
    %v652 = vunpack.c.l.s4 1966171168
    %v653 = vunpack.c.0.s8 %v652
    %v654 = vlaneseq
    %v655 = vshrl.u32 %v654, 7
    %v656 = vsub.s32 %v653, %v655
    %v657 = vrot.slane %v646, %v656
    %v659 = vunpack.c.l.s4 1966171168
    %v660 = vunpack.c.0.s8 %v659
    %v661 = vlaneseq
    %v662 = vshrl.u32 %v661, 7
    %v663 = vsub.s32 %v660, %v662
    %v664 = vrot.slane %v657, %v663
    %v666 = vunpack.c.l.s4 1966171168
    %v667 = vunpack.c.0.s8 %v666
    %v668 = vlaneseq
    %v669 = vshrl.u32 %v668, 7
    %v670 = vsub.s32 %v667, %v669
    %v671 = vrot.slane %v650, %v670
    %v673 = vunpack.c.l.s4 1966171168
    %v674 = vunpack.c.0.s8 %v673
    %v675 = vlaneseq
    %v676 = vshrl.u32 %v675, 7
    %v677 = vsub.s32 %v674, %v676
    %v678 = vrot.slane %v671, %v677
    %v681 = vmul.f32 %v415, %v664
    %v682 = vmul.f32 %v417, %v678
    %v685 = vcombine.low %v681, %v682
    %v687 = vunpack.c.l.s4 1966171168
    %v688 = vunpack.c.0.s8 %v687
    %v689 = vlaneseq
    %v690 = vshrl.u32 %v689, 7
    %v691 = vsub.s32 %v688, %v690
    %v692 = vrot.slane %v685, %v691
    %v694 = vunpack.c.l.s4 1966171168
    %v695 = vunpack.c.0.s8 %v694
    %v696 = vlaneseq
    %v697 = vshrl.u32 %v696, 7
    %v698 = vsub.s32 %v695, %v697
    %v699 = vrot.slane %v692, %v698
    %v701 = vsel %vm397, %v699, 0.0
    %702 = vadd.xlane.f32.xlu0 %v701
    %v703 = vpop.xlane.xlu0 %702
    %v704 = vrcp.pop %v438
    %v705 = vmul.f32 %v703, %v704
    %s706 = sld [smem:[#allocation3]]
    %v707 = vstv %s706
    %v708 = vadd.f32 %v705, %v707
    %v710 = vlaneseq
    %v711 = vshrl.u32 %v710, 7
    %v712 = vsub.s32 %v338, %v711
    %v713 = vrot.slane %v708, %v712
    %vm715 = vcmask 8192
    %716 = vst.msk [vmem:[#allocation7] sm:$0x1] %vm715, %v713
    // Predicated region
    $region26: #{tpu_custom_call.1} parent=1 // pred_check
      _
    $region27: #{tpu_custom_call.1} parent=1 // pred_check_branch
      %718 = sbr.rel (0) target = $region29
    $region28: #{tpu_custom_call.1} parent=1 // pred_region
      %s720 = ssub.s32 16, 16
      %721 = vsyncadd [#allocation6], %s720
      %s723 = sshll.u32 [#allocation7], 4
      %s724 = int_to_ptr.vmem [resolvable:$true] %s723
      %726 = dma.vmem_to_hbm [thread:$0]  %s724, 16, %s5, [#allocation6]
    $region29: #{tpu_custom_call.1} parent=1 // pred_fallthru
      _
    // Predicated region
    $region30: #{tpu_custom_call.1} parent=1 // pred_check
      _
    $region31: #{tpu_custom_call.1} parent=1 // pred_check_branch
      %728 = sbr.rel (0) target = $region33
    $region32: #{tpu_custom_call.1} parent=1 // pred_region
      %729 = dma.done [#allocation6], 16
    $region33: #{tpu_custom_call.1} parent=1 // pred_fallthru
      _
    %730 = vsyncpa [#allocation5], 1
    %731 = vsyncpa [#allocation6], 1

</llo_original>
